<compile_context>
chip_gen: v6e
topology: v6e:2x2x1
jax: 0.10.0
libtpu: 0.0.40
codegen_flags: <defaults>
</compile_context>

<pallas_src>
import math

import jax
import jax.numpy as jnp
from jax import lax
from jax.experimental import pallas as pl
from jax.experimental.pallas import tpu as pltpu

NEG = float("-inf")  # python float -> jaxpr literal


def _round_up(x, m):
    return ((x + m - 1) // m) * m


def _choose_tile(n, t_max):
    """Row tile: multiple of 8, <= t_max.  When the whole problem would fit one tile,
    split it into two so ("parallel",) grids span both TensorCores on v7x."""
    n8 = _round_up(n, 8)
    if n8 <= t_max:
        return _round_up((n + 1) // 2, 8) if n > 8 else n8
    return t_max


# ---------------------------------------------------------------------------
# Kernel 1: per-input-point bias, computed once per point.
#   biased[n, :] = f[n, :] + relu(p[n, :] @ W1.T + b1) @ W2.T + b2
# ---------------------------------------------------------------------------
def _bias_kernel(f_ref, p_ref, w1t_ref, b1_ref, w2t_ref, b2_ref, o_ref):
    pg = p_ref[...].astype(jnp.float32)                   # (Tn, Cin)
    cin = pg.shape[1]
    # layer 1: Cin (=3) is far too small for the MXU -> unrolled VPU broadcast-mul-add
    h = jnp.zeros((pg.shape[0], 32), jnp.float32) + b1_ref[...]
    for j in range(cin):
        h = h + pg[:, j:j + 1] * w1t_ref[j:j + 1, :]
    h = jnp.maximum(h, 0.0)
    # layer 2 on the MXU: (Tn, 32) @ (32, C).  Kernel is HBM-bound; MXU shape is fine as-is.
    bias = jnp.dot(h, w2t_ref[...], preferred_element_type=jnp.float32) + b2_ref[...]
    o_ref[...] = (f_ref[...].astype(jnp.float32) + bias).astype(o_ref.dtype)


def _biased_features(f, p, W1, b1, W2, b2, Tn=1024):
    N, C = f.shape
    Cin = p.shape[1]
    Tn = _choose_tile(N, Tn)
    n_pad = _round_up(N, Tn)
    if n_pad != N:
        f = jnp.pad(f, ((0, n_pad - N), (0, 0)))
        p = jnp.pad(p, ((0, n_pad - N), (0, 0)))

    flops = n_pad * (2 * Cin * 32 + 2 * 32 * C + 2 * C)
    bytes_accessed = n_pad * (2 * C + Cin) * 4 + (Cin * 32 + 32 + 32 * C + C) * 4

    return pl.pallas_call(
        _bias_kernel,
        out_shape=jax.ShapeDtypeStruct((n_pad, C), f.dtype),
        grid_spec=pltpu.PrefetchScalarGridSpec(
            num_scalar_prefetch=0,
            grid=(n_pad // Tn,),
            in_specs=[
                pl.BlockSpec((Tn, C), lambda i: (i, 0)),      # f
                pl.BlockSpec((Tn, Cin), lambda i: (i, 0)),    # p
                pl.BlockSpec((Cin, 32), lambda i: (0, 0)),    # W1^T
                pl.BlockSpec((1, 32), lambda i: (0, 0)),      # b1
                pl.BlockSpec((32, C), lambda i: (0, 0)),      # W2^T
                pl.BlockSpec((1, C), lambda i: (0, 0)),       # b2
            ],
            out_specs=pl.BlockSpec((Tn, C), lambda i: (i, 0)),
        ),
        compiler_params=pltpu.CompilerParams(
            dimension_semantics=("parallel",),
            vmem_limit_bytes=32 * 1024 * 1024),
        cost_estimate=pl.CostEstimate(flops=flops, transcendentals=0,
                                      bytes_accessed=bytes_accessed),
    )(f, p, W1.T, b1.reshape(1, 32), W2.T, b2.reshape(1, C))


# ---------------------------------------------------------------------------
# Kernel 2: masked segment max / argmax over the dense contributor table.
#   resident=True : gather rows from a VMEM-resident `biased` by scalar index.
#   resident=False: read the pre-gathered flat (To*Kmax, C) slab for this tile.
# Accumulators live in vregs (8-row chunks); one (8, C) store per chunk per output.
# ---------------------------------------------------------------------------
def _make_gather_max_kernel(To, Kmax, C, resident, Rc=8):
    # TODO(synk): for Kmax >> 16 the fully unrolled (Rc * Kmax) inner body gets large;
    #             switch the k loop to lax.fori_loop with a small unroll factor.
    def kernel(idx_smem, src_ref, out_ref, midx_ref):
        def chunk_body(c, carry):
            r0 = pl.multiple_of(c * Rc, Rc)
            best_rows = []
            idx_rows = []
            for r in range(Rc):
                t = r0 + r
                best = jnp.full((1, C), NEG, jnp.float32)
                best_idx = jnp.full((1, C), -1, jnp.int32)
                for k in range(Kmax):
                    src = idx_smem[t * Kmax + k]              # SMEM scalar (global row idx)
                    if resident:
                        row = src_ref[pl.ds(jnp.maximum(src, 0), 1), :]   # clamp -1 sentinel
                    else:
                        row = src_ref[pl.ds(t * Kmax + k, 1), :]          # pre-gathered slab
                    row = jnp.where(src >= 0, row.astype(jnp.float32), NEG)
                    upd = row > best
                    best = jnp.where(upd, row, best)
                    best_idx = jnp.where(upd, jnp.full((1, C), src, jnp.int32), best_idx)
                best_rows.append(best)
                idx_rows.append(best_idx)
            out_ref[pl.ds(r0, Rc), :] = (
                jnp.concatenate(best_rows, axis=0).astype(out_ref.dtype))
            midx_ref[pl.ds(r0, Rc), :] = jnp.concatenate(idx_rows, axis=0)
            return carry

        lax.fori_loop(0, To // Rc, chunk_body, 0)

    return kernel


def biasnet_forward(f, p, rulebook, W1, b1, W2, b2, num_output, Kmax,
                    To=512, resident_bytes=8 * 1024 * 1024,
                    force_dense_fallback=False):
    """BiasNet forward. Returns (output [num_output, C], max_indices [num_output, C])."""
    N, C = f.shape
    M = rulebook.shape[0]

    in_idx = rulebook[:, 0].astype(jnp.int32)
    out_idx = rulebook[:, 1].astype(jnp.int32)

    # ---- Step 1: per-point bias, computed once per input point ----
    biased = _biased_features(f, p, W1, b1, W2, b2)
    n_rows = biased.shape[0]

    # ---- Step 2: pack rulebook into a dense [num_output, Kmax] contributor table ----
    # O(M log M) argsort-based rank-within-group.
    order = jnp.argsort(out_idx, stable=True)
    sorted_out = out_idx[order]
    ar = jnp.arange(M, dtype=jnp.int32)
    is_start = jnp.concatenate(
        [jnp.ones((1,), jnp.bool_), sorted_out[1:] != sorted_out[:-1]])
    group_start = lax.cummax(jnp.where(is_start, ar, 0), axis=0)
    rank_sorted = ar - group_start
    slot = jnp.zeros((M,), jnp.int32).at[order].set(rank_sorted)
    # Invalid slots keep -1 (validity folded into the index sentinel).  Entries beyond Kmax
    # contributors per output are dropped (mode="drop") -- size Kmax for the worst-case group.
    dense_idx = jnp.full((num_output, Kmax), -1, jnp.int32)
    dense_idx = dense_idx.at[out_idx, slot].set(in_idx, mode="drop")

    # ---- Step 3: pad output rows and run the segment max / argmax kernel ----
    To = _choose_tile(num_output, To)
    no_p = _round_up(num_output, To)
    if no_p != num_output:
        dense_idx = jnp.pad(dense_idx, ((0, no_p - num_output), (0, 0)),
                            constant_values=-1)
    idx_flat = dense_idx.reshape(-1)

    resident = (not force_dense_fallback) and (
        n_rows * C * biased.dtype.itemsize <= resident_bytes)

    if resident:
        # `biased` stays resident in VMEM across grid steps (constant index_map).
        src = biased
        src_spec = pl.BlockSpec((n_rows, C), lambda i: (0, 0))
        gathered_rows = n_rows
    else:
        # Large-N fallback: regular, full-bandwidth streaming of an XLA-gathered slab.
        # TODO(synk): for very large rulebooks, stream sorted contiguous segments
        #             (run-length offsets in SMEM) instead of the Kmax-dense gather.
        src = jnp.take(biased, jnp.maximum(dense_idx, 0).reshape(-1), axis=0)
        src_spec = pl.BlockSpec((To * Kmax, C), lambda i: (i, 0))
        gathered_rows = no_p * Kmax

    flops = no_p * Kmax * C * 3
    bytes_accessed = gathered_rows * C * 4 + no_p * Kmax * 4 + no_p * C * 8

    kernel = _make_gather_max_kernel(To, Kmax, C, resident)
    out, midx = pl.pallas_call(
        kernel,
        out_shape=(jax.ShapeDtypeStruct((no_p, C), f.dtype),
                   jax.ShapeDtypeStruct((no_p, C), jnp.int32)),
        grid_spec=pltpu.PrefetchScalarGridSpec(
            num_scalar_prefetch=0,
            grid=(no_p // To,),
            in_specs=[
                # per-tile contributor indices, a few KiB of SMEM pipelined with the grid
                pl.BlockSpec((To * Kmax,), lambda i: (i,),
                             memory_space=pltpu.MemorySpace.SMEM),
                src_spec,
            ],
            out_specs=(pl.BlockSpec((To, C), lambda i: (i, 0)),
                       pl.BlockSpec((To, C), lambda i: (i, 0))),
        ),
        compiler_params=pltpu.CompilerParams(
            dimension_semantics=("parallel",),
            vmem_limit_bytes=32 * 1024 * 1024),
        cost_estimate=pl.CostEstimate(flops=flops, transcendentals=0,
                                      bytes_accessed=bytes_accessed),
    )(idx_flat, src)

    return out[:num_output], midx[:num_output]


if __name__ == "__main__":
    key = jax.random.PRNGKey(0)
    k1, k2, k3, k4, k5 = jax.random.split(key, 5)

    # BiasNet requires C > 32 and C % 32 == 0
    N, C, C_in = 16, 128, 3
    num_output, Kmax = 8, 4

    f = jax.random.normal(k1, (N, C), jnp.float32)
    p = jax.random.normal(k2, (N, C_in), jnp.float32)

    # rulebook: every output index gets 3 contributing input points (<= Kmax)
    out_idx = jnp.repeat(jnp.arange(num_output, dtype=jnp.int32), 3)
    in_idx = jax.random.randint(k3, (out_idx.shape[0],), 0, N, dtype=jnp.int32)
    rulebook = jnp.stack([in_idx, out_idx], axis=1)

    # deterministic kaiming-uniform init (relu gain), zeros for biases (matches __init__)
    bound1 = math.sqrt(2.0) * math.sqrt(3.0 / C_in)
    W1 = jax.random.uniform(k4, (32, C_in), jnp.float32, -bound1, bound1)
    b1 = jnp.zeros((32,), jnp.float32)
    bound2 = math.sqrt(2.0) * math.sqrt(3.0 / 32)
    W2 = jax.random.uniform(k5, (C, 32), jnp.float32, -bound2, bound2)
    b2 = jnp.zeros((C,), jnp.float32)

    # ---- pure-JAX reference ----
    bias = jnp.maximum(p @ W1.T + b1, 0.0) @ W2.T + b2      # [N, C]
    biased_ref = f + bias                                   # [N, C]
    cand = biased_ref[in_idx]                               # [M, C]
    ref = jax.ops.segment_max(cand, out_idx, num_segments=num_output)

    # Exercise both the VMEM-resident path and the dense streaming fallback.
    for force_dense in (False, True):
        out, midx = biasnet_forward(f, p, rulebook, W1, b1, W2, b2,
                                    num_output, Kmax,
                                    force_dense_fallback=force_dense)
        out = jax.block_until_ready(out)
        midx = jax.block_until_ready(midx)
        assert out.shape == (num_output, C) and midx.shape == (num_output, C)
        assert jnp.allclose(out, ref, atol=1e-4, rtol=1e-4), "output mismatch vs reference"
        # max_indices consistency: the value at the returned index must equal the output
        chosen = jnp.take_along_axis(biased_ref, midx, axis=0)
        assert jnp.allclose(chosen, out, atol=1e-4, rtol=1e-4), "max_indices mismatch"

    print("KERNEL_OK")
</pallas_src>

<mosaic_0001>
module attributes {stable_mosaic.version = 11 : i64} {
  func.func @_bias_kernel(%arg0: i32, %arg1: memref<8x128xf32, #tpu.memory_space<vmem>>, %arg2: memref<8x3xf32, #tpu.memory_space<vmem>>, %arg3: memref<3x32xf32, #tpu.memory_space<vmem>>, %arg4: memref<1x32xf32, #tpu.memory_space<vmem>>, %arg5: memref<32x128xf32, #tpu.memory_space<vmem>>, %arg6: memref<1x128xf32, #tpu.memory_space<vmem>>, %arg7: memref<8x128xf32, #tpu.memory_space<vmem>>) attributes {dimension_semantics = [#tpu.dimension_semantics<parallel>], iteration_bounds = array<i64: 2>, scalar_prefetch = 0 : i64, scratch_operands = 0 : i64, tpu.core_type = #tpu.core_type<tc>, window_params = [{transform_indices = @transform_0, window_bounds = array<i64: 8, 128>}, {transform_indices = @transform_1, window_bounds = array<i64: 8, 3>}, {pipeline_mode = #tpu.pipeline_mode<synchronous>, transform_indices = @transform_2, window_bounds = array<i64: 3, 32>}, {pipeline_mode = #tpu.pipeline_mode<synchronous>, transform_indices = @transform_3, window_bounds = array<i64: 1, 32>}, {pipeline_mode = #tpu.pipeline_mode<synchronous>, transform_indices = @transform_4, window_bounds = array<i64: 32, 128>}, {pipeline_mode = #tpu.pipeline_mode<synchronous>, transform_indices = @transform_5, window_bounds = array<i64: 1, 128>}, {transform_indices = @transform_6, window_bounds = array<i64: 8, 128>}]} {
    %c0 = arith.constant 0 : index
    %c0_0 = arith.constant 0 : index
    %0 = vector.load %arg2[%c0, %c0_0] : memref<8x3xf32, #tpu.memory_space<vmem>>, vector<8x3xf32>
    %cst = arith.constant 0.000000e+00 : f32
    %1 = vector.broadcast %cst : f32 to vector<8x32xf32>
    %c0_1 = arith.constant 0 : index
    %c0_2 = arith.constant 0 : index
    %2 = vector.load %arg4[%c0_1, %c0_2] : memref<1x32xf32, #tpu.memory_space<vmem>>, vector<1x32xf32>
    %3 = vector.broadcast %2 : vector<1x32xf32> to vector<8x32xf32>
    %4 = arith.addf %1, %3 : vector<8x32xf32>
    %5 = vector.extract_strided_slice %0 {offsets = [0, 0], sizes = [8, 1], strides = [1, 1]} : vector<8x3xf32> to vector<8x1xf32>
    %c0_3 = arith.constant 0 : index
    %c0_4 = arith.constant 0 : index
    %6 = vector.load %arg3[%c0_3, %c0_4] : memref<3x32xf32, #tpu.memory_space<vmem>>, vector<1x32xf32>
    %7 = vector.broadcast %5 : vector<8x1xf32> to vector<8x32xf32>
    %8 = vector.broadcast %6 : vector<1x32xf32> to vector<8x32xf32>
    %9 = arith.mulf %7, %8 : vector<8x32xf32>
    %10 = arith.addf %4, %9 : vector<8x32xf32>
    %11 = vector.extract_strided_slice %0 {offsets = [0, 1], sizes = [8, 1], strides = [1, 1]} : vector<8x3xf32> to vector<8x1xf32>
    %c1 = arith.constant 1 : index
    %c0_5 = arith.constant 0 : index
    %12 = vector.load %arg3[%c1, %c0_5] : memref<3x32xf32, #tpu.memory_space<vmem>>, vector<1x32xf32>
    %13 = vector.broadcast %11 : vector<8x1xf32> to vector<8x32xf32>
    %14 = vector.broadcast %12 : vector<1x32xf32> to vector<8x32xf32>
    %15 = arith.mulf %13, %14 : vector<8x32xf32>
    %16 = arith.addf %10, %15 : vector<8x32xf32>
    %17 = vector.extract_strided_slice %0 {offsets = [0, 2], sizes = [8, 1], strides = [1, 1]} : vector<8x3xf32> to vector<8x1xf32>
    %c2 = arith.constant 2 : index
    %c0_6 = arith.constant 0 : index
    %18 = vector.load %arg3[%c2, %c0_6] : memref<3x32xf32, #tpu.memory_space<vmem>>, vector<1x32xf32>
    %19 = vector.broadcast %17 : vector<8x1xf32> to vector<8x32xf32>
    %20 = vector.broadcast %18 : vector<1x32xf32> to vector<8x32xf32>
    %21 = arith.mulf %19, %20 : vector<8x32xf32>
    %22 = arith.addf %16, %21 : vector<8x32xf32>
    %cst_7 = arith.constant 0.000000e+00 : f32
    %23 = vector.broadcast %cst_7 : f32 to vector<8x32xf32>
    %24 = arith.maximumf %22, %23 : vector<8x32xf32>
    %c0_8 = arith.constant 0 : index
    %c0_9 = arith.constant 0 : index
    %25 = vector.load %arg5[%c0_8, %c0_9] : memref<32x128xf32, #tpu.memory_space<vmem>>, vector<32x128xf32>
    %cst_10 = arith.constant dense<0.000000e+00> : vector<8x128xf32>
    %26 = tpu.matmul %24, %25, %cst_10 {dimension_numbers = #tpu.dot_dimension_numbers<[1], [0], [0], [1], [0, 0, 1, 1], [], []>} : vector<8x32xf32>, vector<32x128xf32>, vector<8x128xf32> -> vector<8x128xf32>
    %c0_11 = arith.constant 0 : index
    %c0_12 = arith.constant 0 : index
    %27 = vector.load %arg6[%c0_11, %c0_12] : memref<1x128xf32, #tpu.memory_space<vmem>>, vector<1x128xf32>
    %28 = vector.broadcast %27 : vector<1x128xf32> to vector<8x128xf32>
    %29 = arith.addf %26, %28 : vector<8x128xf32>
    %c0_13 = arith.constant 0 : index
    %c0_14 = arith.constant 0 : index
    %30 = vector.load %arg1[%c0_13, %c0_14] : memref<8x128xf32, #tpu.memory_space<vmem>>, vector<8x128xf32>
    %31 = arith.addf %30, %29 : vector<8x128xf32>
    %c0_15 = arith.constant 0 : index
    %c0_16 = arith.constant 0 : index
    %32 = vector.load %arg7[%c0_15, %c0_16] : memref<8x128xf32, #tpu.memory_space<vmem>>, vector<8x128xf32>
    tpu.vector_store %arg7[%c0_15, %c0_16], %31 {strides = array<i32>} : memref<8x128xf32, #tpu.memory_space<vmem>>, vector<8x128xf32>,
    return
  }
  func.func @transform_0(%arg0: i32) -> (i32, i32) {
    %c0_i32 = arith.constant 0 : i32
    %c0_i32_0 = arith.constant 0 : i32
    return %arg0, %c0_i32 : i32, i32
  }
  func.func @transform_1(%arg0: i32) -> (i32, i32) {
    %c0_i32 = arith.constant 0 : i32
    %c0_i32_0 = arith.constant 0 : i32
    return %arg0, %c0_i32 : i32, i32
  }
  func.func @transform_2(%arg0: i32) -> (i32, i32) {
    %c0_i32 = arith.constant 0 : i32
    %c0_i32_0 = arith.constant 0 : i32
    %c0_i32_1 = arith.constant 0 : i32
    return %c0_i32, %c0_i32_0 : i32, i32
  }
  func.func @transform_3(%arg0: i32) -> (i32, i32) {
    %c0_i32 = arith.constant 0 : i32
    %c0_i32_0 = arith.constant 0 : i32
    %c0_i32_1 = arith.constant 0 : i32
    return %c0_i32, %c0_i32_0 : i32, i32
  }
  func.func @transform_4(%arg0: i32) -> (i32, i32) {
    %c0_i32 = arith.constant 0 : i32
    %c0_i32_0 = arith.constant 0 : i32
    %c0_i32_1 = arith.constant 0 : i32
    return %c0_i32, %c0_i32_0 : i32, i32
  }
  func.func @transform_5(%arg0: i32) -> (i32, i32) {
    %c0_i32 = arith.constant 0 : i32
    %c0_i32_0 = arith.constant 0 : i32
    %c0_i32_1 = arith.constant 0 : i32
    return %c0_i32, %c0_i32_0 : i32, i32
  }
  func.func @transform_6(%arg0: i32) -> (i32, i32) {
    %c0_i32 = arith.constant 0 : i32
    %c0_i32_0 = arith.constant 0 : i32
    return %arg0, %c0_i32 : i32, i32
  }
}

</mosaic_0001>

<llo_original>
// kernel: tpu_custom_call.1
$region0: #{tpu_custom_call.1}
  #allocation0 [shape = 'u32[]', space=smem, size = 0x4, offset = 0x4, fixed_abs, tag = 'smem constant byte address 0x4 - core index']
  #allocation1 [shape = 'u32[144,128]{1,0:T(1,128)}', space=vmem, size = 0x12000, scoped, tag = 'internal scratch']
  %s0 = inlined_call_operand.vmem [shape: f32[16,128], index: 0, kind: input, shape index: {}]
  %s1 = inlined_call_operand.vmem [shape: f32[16,3], index: 1, kind: input, shape index: {}]
  %s2 = inlined_call_operand.vmem [shape: f32[3,32], index: 2, kind: input, shape index: {}]
  %s3 = inlined_call_operand.vmem [shape: f32[1,32], index: 3, kind: input, shape index: {}]
  %s4 = inlined_call_operand.hbm [shape: f32[32,128], index: 4, kind: input, shape index: {}]
  %s5 = inlined_call_operand.vmem [shape: f32[1,128], index: 5, kind: input, shape index: {}]
  %s6 = inlined_call_operand.hbm [shape: f32[16,128], index: 6, kind: output, shape index: {}]
  %s7 = sld [smem:[#allocation0]]
  $region61: #{tpu_custom_call.1} parent=0
    _
  %s9 = ssub.s32 1, %s7
  %s10 = scalar_select 0, %s9, %s7
  $region1: #{tpu_custom_call.1} parent=0
    #allocation2 [shape = 'u8[16384]{0}', space=vmem, size = 0x4000, scoped, tag = 'input window, operand 4, single buffered']
    #allocation3 [shape = 's32[2]{0}', space=sflag, size = 0x8, scoped, tag = 'scoped memory for tpu_custom_call.1']
    #allocation4 [shape = 's32[2]{0}', space=sflag, size = 0x8, scoped, tag = 'scoped memory for tpu_custom_call.1']
    #allocation5 [shape = 'u8[8192]{0}', space=vmem, size = 0x2000, scoped, tag = 'output window, operand 0']
    %11 = vsyncpa [#allocation3], 0
    %12 = vsyncpa [#allocation4], 0
    %s13 = scalar_lea.sflag [#allocation4], 1
    %14 = vsyncpa %s13, 0
    loop: start=0, step=1, limit=4
    $region2: #{tpu_custom_call.1} parent=1 // loop_pre_header
      _
    $region3: #{tpu_custom_call.1} parent=1 // loop_header
      %s16 = sphi 0, %s20
      %p17 = scmp.ge.s32.totalorder %s16, 4
      %s26 = sphi 0, %s28
      %s29 = sphi 0, %s26
      %s30 = sphi 0, %s29
      %s46 = sphi 0, %s30
      %s52 = sphi 0, %s54
      %s55 = sphi 0, %s52
      %s56 = sphi 0, %s55
      %s72 = sphi 0, %s56
      %s76 = sphi 0, %s76
      %s78 = sphi 0, %s76
      %s79 = sphi 0, %s78
      %s93 = sphi 0, %s79
      %s97 = sphi 0, %s97
      %s99 = sphi 0, %s97
      %s100 = sphi 0, %s99
      %s114 = sphi 0, %s100
      %s118 = sphi 0, %s118
      %s120 = sphi 0, %s118
      %s121 = sphi 0, %s120
      %s135 = sphi 0, %s121
      %s139 = sphi 0, %s139
      %s141 = sphi 0, %s139
      %s142 = sphi 0, %s141
      %s156 = sphi 0, %s142
      %s162 = sphi 0, %s164
      %s165 = sphi 0, %s162
      %s166 = sphi 0, %s165
      %s182 = sphi 0, %s166
    $region4: #{tpu_custom_call.1} parent=1 // loop_header_branch
      %19 = sbr.rel (%p17) target = $region8
    $region5: #{tpu_custom_call.1} parent=1 // loop_body
      %s21 = ssub.s32 %s16, 1
      %s22 = ssub.s32 %s16, 2
      %s23 = sadd.s32 %s16, 1
      %s24 = ssub.s32 %s16, %s23
      %p25 = scmp.eq.s32.totalorder %s24, 0
      %s27 = sadd.s32 %s26, 1
      %s28 = scalar_select %p25, %s26, %s27
      %p31 = pneg %p25
      %p32 = scmp.eq.s32.totalorder %s16, 1
      %p33 = por %p31, %p32
      %p34 = scmp.ne.s32.totalorder %s26, %s29
      %p35 = scmp.eq.s32.totalorder %s16, 0
      %p36 = por %p34, %p35
      %p37 = scmp.ne.s32.totalorder %s26, %s29
      %p38 = scmp.eq.s32.totalorder %s21, 1
      %p39 = por %p37, %p38
      %p40 = scmp.ne.s32.totalorder %s29, %s30
      %p41 = scmp.eq.s32.totalorder %s21, 0
      %p42 = por %p40, %p41
      %p43 = scmp.ne.s32.totalorder %s29, %s30
      %p44 = scmp.eq.s32.totalorder %s22, 1
      %p45 = por %p43, %p44
      %p47 = scmp.ne.s32.totalorder %s30, %s46
      %p48 = scmp.eq.s32.totalorder %s22, 0
      %p49 = por %p47, %p48
      %s50 = ssub.s32 %s16, %s23
      %p51 = scmp.eq.s32.totalorder %s50, 0
      %s53 = sadd.s32 %s52, 1
      %s54 = scalar_select %p51, %s52, %s53
      %p57 = pneg %p51
      %p58 = scmp.eq.s32.totalorder %s16, 1
      %p59 = por %p57, %p58
      %p60 = scmp.ne.s32.totalorder %s52, %s55
      %p61 = scmp.eq.s32.totalorder %s16, 0
      %p62 = por %p60, %p61
      %p63 = scmp.ne.s32.totalorder %s52, %s55
      %p64 = scmp.eq.s32.totalorder %s21, 1
      %p65 = por %p63, %p64
      %p66 = scmp.ne.s32.totalorder %s55, %s56
      %p67 = scmp.eq.s32.totalorder %s21, 0
      %p68 = por %p66, %p67
      %p69 = scmp.ne.s32.totalorder %s55, %s56
      %p70 = scmp.eq.s32.totalorder %s22, 1
      %p71 = por %p69, %p70
      %p73 = scmp.ne.s32.totalorder %s56, %s72
      %p74 = scmp.eq.s32.totalorder %s22, 0
      %p75 = por %p73, %p74
      %s77 = sadd.s32 %s76, 1
      %p80 = scmp.eq.s32.totalorder %s16, 1
      %p81 = scmp.ne.s32.totalorder %s76, %s78
      %p82 = scmp.eq.s32.totalorder %s16, 0
      %p83 = por %p81, %p82
      %p84 = scmp.ne.s32.totalorder %s76, %s78
      %p85 = scmp.eq.s32.totalorder %s21, 1
      %p86 = por %p84, %p85
      %p87 = scmp.ne.s32.totalorder %s78, %s79
      %p88 = scmp.eq.s32.totalorder %s21, 0
      %p89 = por %p87, %p88
      %p90 = scmp.ne.s32.totalorder %s78, %s79
      %p91 = scmp.eq.s32.totalorder %s22, 1
      %p92 = por %p90, %p91
      %p94 = scmp.ne.s32.totalorder %s79, %s93
      %p95 = scmp.eq.s32.totalorder %s22, 0
      %p96 = por %p94, %p95
      %s98 = sadd.s32 %s97, 1
      %p101 = scmp.eq.s32.totalorder %s16, 1
      %p102 = scmp.ne.s32.totalorder %s97, %s99
      %p103 = scmp.eq.s32.totalorder %s16, 0
      %p104 = por %p102, %p103
      %p105 = scmp.ne.s32.totalorder %s97, %s99
      %p106 = scmp.eq.s32.totalorder %s21, 1
      %p107 = por %p105, %p106
      %p108 = scmp.ne.s32.totalorder %s99, %s100
      %p109 = scmp.eq.s32.totalorder %s21, 0
      %p110 = por %p108, %p109
      %p111 = scmp.ne.s32.totalorder %s99, %s100
      %p112 = scmp.eq.s32.totalorder %s22, 1
      %p113 = por %p111, %p112
      %p115 = scmp.ne.s32.totalorder %s100, %s114
      %p116 = scmp.eq.s32.totalorder %s22, 0
      %p117 = por %p115, %p116
      %s119 = sadd.s32 %s118, 1
      %p122 = scmp.eq.s32.totalorder %s16, 1
      %p123 = scmp.ne.s32.totalorder %s118, %s120
      %p124 = scmp.eq.s32.totalorder %s16, 0
      %p125 = por %p123, %p124
      %p126 = scmp.ne.s32.totalorder %s118, %s120
      %p127 = scmp.eq.s32.totalorder %s21, 1
      %p128 = por %p126, %p127
      %p129 = scmp.ne.s32.totalorder %s120, %s121
      %p130 = scmp.eq.s32.totalorder %s21, 0
      %p131 = por %p129, %p130
      %p132 = scmp.ne.s32.totalorder %s120, %s121
      %p133 = scmp.eq.s32.totalorder %s22, 1
      %p134 = por %p132, %p133
      %p136 = scmp.ne.s32.totalorder %s121, %s135
      %p137 = scmp.eq.s32.totalorder %s22, 0
      %p138 = por %p136, %p137
      %s140 = sadd.s32 %s139, 1
      %p143 = scmp.eq.s32.totalorder %s16, 1
      %p144 = scmp.ne.s32.totalorder %s139, %s141
      %p145 = scmp.eq.s32.totalorder %s16, 0
      %p146 = por %p144, %p145
      %p147 = scmp.ne.s32.totalorder %s139, %s141
      %p148 = scmp.eq.s32.totalorder %s21, 1
      %p149 = por %p147, %p148
      %p150 = scmp.ne.s32.totalorder %s141, %s142
      %p151 = scmp.eq.s32.totalorder %s21, 0
      %p152 = por %p150, %p151
      %p153 = scmp.ne.s32.totalorder %s141, %s142
      %p154 = scmp.eq.s32.totalorder %s22, 1
      %p155 = por %p153, %p154
      %p157 = scmp.ne.s32.totalorder %s142, %s156
      %p158 = scmp.eq.s32.totalorder %s22, 0
      %p159 = por %p157, %p158
      %s160 = ssub.s32 %s16, %s23
      %p161 = scmp.eq.s32.totalorder %s160, 0
      %s163 = sadd.s32 %s162, 1
      %s164 = scalar_select %p161, %s162, %s163
      %p167 = pneg %p161
      %p168 = scmp.eq.s32.totalorder %s16, 1
      %p169 = por %p167, %p168
      %p170 = scmp.ne.s32.totalorder %s162, %s165
      %p171 = scmp.eq.s32.totalorder %s16, 0
      %p172 = por %p170, %p171
      %p173 = scmp.ne.s32.totalorder %s162, %s165
      %p174 = scmp.eq.s32.totalorder %s21, 1
      %p175 = por %p173, %p174
      %p176 = scmp.ne.s32.totalorder %s165, %s166
      %p177 = scmp.eq.s32.totalorder %s21, 0
      %p178 = por %p176, %p177
      %p179 = scmp.ne.s32.totalorder %s165, %s166
      %p180 = scmp.eq.s32.totalorder %s22, 1
      %p181 = por %p179, %p180
      %p183 = scmp.ne.s32.totalorder %s166, %s182
      %p184 = scmp.eq.s32.totalorder %s22, 0
      %p185 = por %p183, %p184
      %p186 = scmp.le.s32.totalorder 1, %s16
      %p187 = scmp.lt.s32.totalorder %s16, 3
      %p188 = pnand %p186, %p187
      %p189 = pneg %p188
      // Predicated region
      $region9: #{tpu_custom_call.1} parent=5 // pred_check
        _
      $region10: #{tpu_custom_call.1} parent=5 // pred_check_branch
        %191 = sbr.rel (%p188) target = $region12
      $region11: #{tpu_custom_call.1} parent=5 // pred_region
        %s192 = ssub.s32 %s16, 1
        // Predicated region
        $region13: #{tpu_custom_call.1} parent=11 // pred_check
          %p193 = pneg %p89
        $region14: #{tpu_custom_call.1} parent=11 // pred_check_branch
          %195 = sbr.rel (%p193) target = $region16
        $region15: #{tpu_custom_call.1} parent=11 // pred_region
          _
        $region16: #{tpu_custom_call.1} parent=11 // pred_fallthru
          _
        // Predicated region
        $region17: #{tpu_custom_call.1} parent=11 // pred_check
          %p196 = pneg %p110
        $region18: #{tpu_custom_call.1} parent=11 // pred_check_branch
          %198 = sbr.rel (%p196) target = $region20
        $region19: #{tpu_custom_call.1} parent=11 // pred_region
          _
        $region20: #{tpu_custom_call.1} parent=11 // pred_fallthru
          _
        // Predicated region
        $region21: #{tpu_custom_call.1} parent=11 // pred_check
          %p199 = pneg %p131
        $region22: #{tpu_custom_call.1} parent=11 // pred_check_branch
          %201 = sbr.rel (%p199) target = $region24
        $region23: #{tpu_custom_call.1} parent=11 // pred_region
          %s203 = ssub.s32 512, 512
          %204 = vsyncadd [#allocation3], %s203
          %s205 = sshll.u32 [#allocation2], 4
          %s206 = int_to_ptr.vmem [resolvable:$true] %s205
          %211 = dma.hbm_to_vmem [thread:$0]  %s4, 512, %s206, [#allocation3], 128, 128, 8
        $region24: #{tpu_custom_call.1} parent=11 // pred_fallthru
          _
        // Predicated region
        $region25: #{tpu_custom_call.1} parent=11 // pred_check
          %p212 = pneg %p152
        $region26: #{tpu_custom_call.1} parent=11 // pred_check_branch
          %214 = sbr.rel (%p212) target = $region28
        $region27: #{tpu_custom_call.1} parent=11 // pred_region
          _
        $region28: #{tpu_custom_call.1} parent=11 // pred_fallthru
          _
      $region12: #{tpu_custom_call.1} parent=5 // pred_fallthru
        _
      %p215 = scmp.lt.s32.totalorder %s16, 2
      // Predicated region
      $region29: #{tpu_custom_call.1} parent=5 // pred_check
        %p216 = pneg %p215
      $region30: #{tpu_custom_call.1} parent=5 // pred_check_branch
        %218 = sbr.rel (%p216) target = $region32
      $region31: #{tpu_custom_call.1} parent=5 // pred_region
        // Predicated region
        $region33: #{tpu_custom_call.1} parent=31 // pred_check
          %p219 = pneg %p36
        $region34: #{tpu_custom_call.1} parent=31 // pred_check_branch
          %221 = sbr.rel (%p219) target = $region36
        $region35: #{tpu_custom_call.1} parent=31 // pred_region
          %p222 = scmp.lt.s32.totalorder %s16, 1
          %s223 = scalar_select %p222, %s16, 1
          %s224 = smul.addr %s223, 8
          %s225 = scalar_lea.vmem %s0, %s224
        $region36: #{tpu_custom_call.1} parent=31 // pred_fallthru
          _
        // Predicated region
        $region37: #{tpu_custom_call.1} parent=31 // pred_check
          %p226 = pneg %p62
        $region38: #{tpu_custom_call.1} parent=31 // pred_check_branch
          %228 = sbr.rel (%p226) target = $region40
        $region39: #{tpu_custom_call.1} parent=31 // pred_region
          %p229 = scmp.lt.s32.totalorder %s16, 1
          %s230 = scalar_select %p229, %s16, 1
          %s231 = smul.addr %s230, 8
          %s232 = scalar_lea.vmem %s1, %s231
        $region40: #{tpu_custom_call.1} parent=31 // pred_fallthru
          _
      $region32: #{tpu_custom_call.1} parent=5 // pred_fallthru
        _
      %p233 = scmp.le.s32.totalorder 1, %s16
      %p234 = scmp.lt.s32.totalorder %s16, 3
      %p235 = pnand %p233, %p234
      %p236 = pneg %p235
      // Predicated region
      $region41: #{tpu_custom_call.1} parent=5 // pred_check
        _
      $region42: #{tpu_custom_call.1} parent=5 // pred_check_branch
        %238 = sbr.rel (%p235) target = $region44
      $region43: #{tpu_custom_call.1} parent=5 // pred_region
        %s239 = ssub.s32 %s16, 1
        // Predicated region
        $region45: #{tpu_custom_call.1} parent=43 // pred_check
          %p240 = pneg %p131
        $region46: #{tpu_custom_call.1} parent=43 // pred_check_branch
          %242 = sbr.rel (%p240) target = $region48
        $region47: #{tpu_custom_call.1} parent=43 // pred_region
          %243 = dma.done [#allocation3], 512
        $region48: #{tpu_custom_call.1} parent=43 // pred_fallthru
          _
        %p244 = scmp.lt.s32.totalorder %s21, 1
        %s245 = scalar_select %p244, %s21, 1
        %s246 = smul.addr %s245, 8
        %s247 = scalar_lea.vmem %s0, %s246
        %p248 = pneg %p42
        %p249 = pneg %p39
        %p250 = scmp.lt.s32.totalorder %s21, 1
        %s251 = scalar_select %p250, %s21, 1
        %s252 = smul.addr %s251, 8
        %s253 = scalar_lea.vmem %s1, %s252
        %p254 = pneg %p68
        %p255 = pneg %p65
        %p256 = pneg %p89
        %p257 = pneg %p86
        %p258 = pneg %p110
        %p259 = pneg %p107
        %p260 = pneg %p131
        %p261 = pneg %p128
        %p262 = pneg %p152
        %p263 = pneg %p149
        %p264 = pneg %p178
        %p265 = pneg %p175
        %s266 = sand.u32 %s165, 1
        %s267 = scalar_lea.sflag [#allocation4], %s266
        %s268 = sand.u32 %s165, 1
        %s269 = smul.addr %s268, 8
        %s270 = scalar_lea.vmem [#allocation5], %s269
        %p271 = scmp.lt.s32.totalorder %s21, 1
        %s272 = scalar_select %p271, %s21, 1
        %s273 = smul.addr %s272, 8
        %s274 = scalar_lea.vmem %s0, %s273
        %p275 = scmp.lt.s32.totalorder %s21, 1
        %s276 = scalar_select %p275, %s21, 1
        %s277 = smul.addr %s276, 8
        %s278 = scalar_lea.vmem %s1, %s277
        %v279 = vld [vmem:[%s278] sm:$0xff]
        %v280 = vld [vmem:[%s3] sm:$0x1]
        %v282 = vlaneseq
        %v283 = vshrl.u32 %v282, 7
        %v284 = vsub.s32 0, %v283
        %v285 = vrot.slane %v280, %v284
        %v287 = vadd.f32 %v285, 0.0
        %v288 = vld [vmem:[%s2] sm:$0x1]
        %290 = vset.pattern.permute.xlu0 0
        %291 = vperm.xlu0 %290, %v279
        %v292 = vpop.permute.xlu0 %291
        %v294 = vlaneseq
        %v295 = vshrl.u32 %v294, 7
        %v296 = vsub.s32 0, %v295
        %v297 = vrot.slane %v288, %v296
        %v298 = vmul.f32 %v292, %v297
        %v299 = vadd.f32 %v287, %v298
        %v300 = vld [vmem:[%s2 + $0x1] sm:$0x1]
        %301 = vset.pattern.permute.xlu0 1
        %302 = vperm.xlu0 %301, %v279
        %v303 = vpop.permute.xlu0 %302
        %v305 = vlaneseq
        %v306 = vshrl.u32 %v305, 7
        %v307 = vsub.s32 0, %v306
        %v308 = vrot.slane %v300, %v307
        %v309 = vmul.f32 %v303, %v308
        %v310 = vadd.f32 %v299, %v309
        %v311 = vld [vmem:[%s2 + $0x2] sm:$0x1]
        %312 = vset.pattern.permute.xlu0 2
        %313 = vperm.xlu0 %312, %v279
        %v314 = vpop.permute.xlu0 %313
        %v316 = vlaneseq
        %v317 = vshrl.u32 %v316, 7
        %v318 = vsub.s32 0, %v317
        %v319 = vrot.slane %v311, %v318
        %v320 = vmul.f32 %v314, %v319
        %v321 = vadd.f32 %v310, %v320
        %v322 = vmax.f32 %v321, 0.0
        %v323 = vld [vmem:[#allocation2] sm:$0xff]
        %v324 = vld [vmem:[#allocation2 + $0x8] sm:$0xff]
        %v325 = vld [vmem:[#allocation2 + $0x10] sm:$0xff]
        %v326 = vld [vmem:[#allocation2 + $0x18] sm:$0xff]
        %v327 = vld [vmem:[%s5] sm:$0x1]
        %v329 = vlaneseq
        %v330 = vshrl.u32 %v329, 7
        %v331 = vsub.s32 0, %v330
        %v332 = vrot.slane %v327, %v331
        %vm334 = vcmask 261120
        %v336 = vsel %vm334, %v322, 0
        %338 = vmatprep.subr.mxu0 0.0
        %339 = vmatpush1.msra.mxu0 0.0
        %340 = vmatprep.subr.mxu0 0.0
        %341 = vmatpush1.msra.mxu0 0.0
        %342 = vmatprep.subr.mxu0 0.0
        %343 = vmatpush1.msra.mxu0 0.0
        %344 = vmatprep.subr.mxu0 0.0
        %345 = vmatpush1.msra.mxu0 0.0
        %346 = vmatprep.subr.mxu0 0.0
        %347 = vmatpush1.msra.mxu0 0.0
        %348 = vmatprep.subr.mxu0 0.0
        %349 = vmatpush1.msra.mxu0 0.0
        %350 = vmatprep.subr.mxu0 0.0
        %351 = vmatpush1.msra.mxu0 0.0
        %352 = vmatprep.subr.mxu0 0.0
        %353 = vmatpush1.msra.mxu0 0.0
        %354 = vmatprep.subr.mxu0 0.0
        %355 = vmatpush1.msra.mxu0 0.0
        %356 = vmatprep.subr.mxu0 0.0
        %357 = vmatpush1.msra.mxu0 0.0
        %358 = vmatprep.subr.mxu0 0.0
        %359 = vmatpush1.msra.mxu0 0.0
        %360 = vmatprep.subr.mxu0 0.0
        %361 = vmatpush1.msra.mxu0 0.0
        %362 = vmatprep.subr.mxu0 0.0
        %363 = vmatpush1.msra.mxu0 %v326
        %364 = vmatprep.subr.mxu0 0.0
        %365 = vmatpush1.msra.mxu0 %v325
        %366 = vmatprep.subr.mxu0 0.0
        %367 = vmatpush1.msra.mxu0 %v324
        %368 = vmatprep.subr.mxu0 0.0
        %369 = vmatpush1.msra.mxu0 %v323
        %370 = vmatprep.subr.mxu0 0.0
        %371 = vmatpush2.msra.mxu0 0.0
        %372 = vmatprep.subr.mxu0 0.0
        %373 = vmatpush2.msra.mxu0 0.0
        %374 = vmatprep.subr.mxu0 0.0
        %375 = vmatpush2.msra.mxu0 0.0
        %376 = vmatprep.subr.mxu0 0.0
        %377 = vmatpush2.msra.mxu0 0.0
        %378 = vmatprep.subr.mxu0 0.0
        %379 = vmatpush2.msra.mxu0 0.0
        %380 = vmatprep.subr.mxu0 0.0
        %381 = vmatpush2.msra.mxu0 0.0
        %382 = vmatprep.subr.mxu0 0.0
        %383 = vmatpush2.msra.mxu0 0.0
        %384 = vmatprep.subr.mxu0 0.0
        %385 = vmatpush2.msra.mxu0 0.0
        %386 = vmatprep.subr.mxu0 0.0
        %387 = vmatpush2.msra.mxu0 0.0
        %388 = vmatprep.subr.mxu0 0.0
        %389 = vmatpush2.msra.mxu0 0.0
        %390 = vmatprep.subr.mxu0 0.0
        %391 = vmatpush2.msra.mxu0 0.0
        %392 = vmatprep.subr.mxu0 0.0
        %393 = vmatpush2.msra.mxu0 0.0
        %394 = vmatprep.subr.mxu0 0.0
        %395 = vmatpush2.msra.mxu0 0.0
        %396 = vmatprep.subr.mxu0 0.0
        %397 = vmatpush2.msra.mxu0 0.0
        %398 = vmatprep.subr.mxu0 0.0
        %399 = vmatpush2.msra.mxu0 0.0
        %400 = vmatprep.subr.mxu0 0.0
        %401 = vmatpush2.msra.mxu0 0.0
        %402 = vmatprep.mubr.f32.mxu0 0.0
        %403 = vmatmul.mubr.f32.gmra.mxu0 %v336
        %v404 = vpop.f32.mrf.mxu0
        %v405 = vadd.f32 %v332, %v404
        %v406 = vpop.f32.mrf.mxu0
        %407 = vdwg.mxu0
        %v408 = vld [vmem:[%s274] sm:$0xff]
        %v409 = vadd.f32 %v408, %v405
        %410 = vst [vmem:[%s270] sm:$0xff] %v409
        %s411 = sand.u32 %s165, 1
        %s412 = scalar_lea.sflag [#allocation4], %s411
        %s413 = sand.u32 %s165, 1
        %s414 = smul.addr %s413, 8
        %s415 = scalar_lea.vmem [#allocation5], %s414
        // Predicated region
        $region49: #{tpu_custom_call.1} parent=43 // pred_check
          %p416 = pneg %p175
        $region50: #{tpu_custom_call.1} parent=43 // pred_check_branch
          %418 = sbr.rel (%p416) target = $region52
        $region51: #{tpu_custom_call.1} parent=43 // pred_region
          %s420 = ssub.s32 128, 128
          %421 = vsyncadd %s412, %s420
          %s422 = smul.addr %s21, 128
          %s423 = scalar_lea.hbm %s6, %s422
          %s425 = sshll.u32 %s415, 4
          %s426 = int_to_ptr.vmem [resolvable:$true] %s425
          %428 = dma.vmem_to_hbm [thread:$0]  %s426, 128, %s423, %s412
        $region52: #{tpu_custom_call.1} parent=43 // pred_fallthru
          _
      $region44: #{tpu_custom_call.1} parent=5 // pred_fallthru
        _
      %p429 = scmp.le.s32.totalorder 2, %s16
      // Predicated region
      $region53: #{tpu_custom_call.1} parent=5 // pred_check
        %p430 = pneg %p429
      $region54: #{tpu_custom_call.1} parent=5 // pred_check_branch
        %432 = sbr.rel (%p430) target = $region56
      $region55: #{tpu_custom_call.1} parent=5 // pred_region
        %s433 = ssub.s32 %s16, 2
        // Predicated region
        $region57: #{tpu_custom_call.1} parent=55 // pred_check
          %p434 = pneg %p181
        $region58: #{tpu_custom_call.1} parent=55 // pred_check_branch
          %436 = sbr.rel (%p434) target = $region60
        $region59: #{tpu_custom_call.1} parent=55 // pred_region
          %s437 = sand.u32 %s166, 1
          %s438 = scalar_lea.sflag [#allocation4], %s437
          %s439 = sand.u32 %s166, 1
          %s440 = smul.addr %s439, 8
          %s441 = scalar_lea.vmem [#allocation5], %s440
          %442 = dma.done %s438, 128
        $region60: #{tpu_custom_call.1} parent=55 // pred_fallthru
          _
      $region56: #{tpu_custom_call.1} parent=5 // pred_fallthru
        _
    $region6: #{tpu_custom_call.1} parent=1 // loop_footer
      %s20 = sadd.s32 1, %s16
    $region7: #{tpu_custom_call.1} parent=1 // loop_footer_branch
      %15 = sbr.rel target = $region3
    $region8: #{tpu_custom_call.1} parent=1 // loop_exit
      _
    %443 = vsyncpa [#allocation3], 1
    %s444 = scalar_lea.sflag [#allocation3], 1
    %445 = vsyncpa %s444, 1
    %446 = vsyncpa [#allocation4], 1
    %s447 = scalar_lea.sflag [#allocation4], 1
    %448 = vsyncpa %s447, 1

</llo_original>
